<compile_context>
chip_gen: v6e
topology: v6e:2x2x1
jax: 0.10.0
libtpu: 0.0.40
codegen_flags: <defaults>
</compile_context>

<pallas_src>
import functools

import jax
import jax.numpy as jnp
from jax import lax
from jax.experimental import pallas as pl
from jax.experimental.pallas import tpu as pltpu


def _round_up(a, m):
    return ((a + m - 1) // m) * m


def _classifier_kernel(x_ref, w_ref, o_ref, *, inv_temp, eps):
    """One (batch-tile, class-tile) block of: o = (x / max(||x||_2, eps)) @ W_t / temp."""
    x = x_ref[...]
    xf = x.astype(jnp.float32)                                 # norm math in f32
    sq = jnp.sum(xf * xf, axis=-1, keepdims=True)              # [tb, 1]
    # rsqrt(max(sq, eps^2)) == 1 / max(||x||_2, eps)  (F.normalize semantics);
    # fold the temperature into the same per-row scale.
    scale = lax.rsqrt(jnp.maximum(sq, eps * eps)) * inv_temp   # [tb, 1]
    xn = (xf * scale).astype(w_ref.dtype)                      # matmul in weight dtype
    out = jnp.dot(xn, w_ref[...], preferred_element_type=jnp.float32)
    o_ref[...] = out.astype(o_ref.dtype)


def classifier_forward(x, w_t, *, temp, out_dtype=None, eps=1e-12):
    """x: [B, inc], w_t: [inc, num_class] (transposed fc weight)."""
    B, inc = x.shape
    inc_w, num_class = w_t.shape
    assert inc == inc_w, (inc, inc_w)
    if out_dtype is None:
        out_dtype = x.dtype
    out_dtype = jnp.dtype(out_dtype)

    # --- lane-dense output: pad num_class to a multiple of 128 and tile it ---
    block_n = min(512, _round_up(num_class, 128))
    n_pad = _round_up(num_class, block_n)

    # --- batch tile: largest multiple of 8 within a conservative VMEM budget
    #     (double-buffered x/out tiles + double-buffered weight tile), cap 512.
    x_isz = jnp.dtype(x.dtype).itemsize
    w_isz = jnp.dtype(w_t.dtype).itemsize
    o_isz = out_dtype.itemsize
    w_tile_bytes = 2 * inc * block_n * w_isz                   # double-buffered weight
    per_row = 2 * (inc * x_isz + block_n * o_isz)              # double-buffered x + out
    budget = 24 << 20                                          # fits v5e/v6e scoped & v7x physical
    max_rows = max(8, ((budget - w_tile_bytes) // per_row) // 8 * 8)
    block_b = max(8, (min(512, _round_up(B, 8), max_rows) // 8) * 8)
    b_pad = _round_up(B, block_b)

    # Zero-pad: zero rows normalize to zero, zero weight columns give zero logits.
    xp = jnp.pad(x, ((0, b_pad - B), (0, 0))) if b_pad != B else x
    wp = jnp.pad(w_t, ((0, 0), (0, n_pad - num_class))) if n_pad != num_class else w_t

    grid = (b_pad // block_b, n_pad // block_n)

    # Explicit scoped-VMEM limit with headroom (v5e default is only 16 MiB;
    # keep the cap at v7x's 64 MiB physical per-TC VMEM).
    vmem_est = w_tile_bytes + block_b * per_row
    vmem_limit = int(min(max(2 * vmem_est + (2 << 20), 32 << 20), 64 << 20))

    kernel = functools.partial(
        _classifier_kernel, inv_temp=1.0 / float(temp), eps=float(eps))

    out = pl.pallas_call(
        kernel,
        out_shape=jax.ShapeDtypeStruct((b_pad, n_pad), out_dtype),
        grid_spec=pltpu.PrefetchScalarGridSpec(
            num_scalar_prefetch=0,
            grid=grid,
            in_specs=[
                # x batch tile; the reduction dim (inc) is kept whole so the
                # L2 norm is computed locally inside one grid step.
                pl.BlockSpec((block_b, inc), lambda i, j: (i, 0)),
                # Weight class tile; block index is constant along the batch
                # axis, so Pallas does not re-DMA it on consecutive steps with
                # the same j.
                pl.BlockSpec((inc, block_n), lambda i, j: (0, j)),
            ],
            out_specs=pl.BlockSpec((block_b, block_n), lambda i, j: (i, j)),
        ),
        compiler_params=pltpu.CompilerParams(
            dimension_semantics=("parallel", "parallel"),
            vmem_limit_bytes=vmem_limit,
        ),
        cost_estimate=pl.CostEstimate(
            flops=2 * b_pad * inc * n_pad,
            transcendentals=b_pad,  # one rsqrt per row
            bytes_accessed=(b_pad * inc * x_isz
                            + inc * n_pad * w_isz
                            + b_pad * n_pad * o_isz),
        ),
    )(xp, wp)

    return out[:B, :num_class]


if __name__ == "__main__":
    # Small shapes consistent with the module: features = inc, classes = num_class.
    B, inc, num_class = 8, 32, 4
    temp = 0.05

    key = jax.random.PRNGKey(0)
    kx, kw = jax.random.split(key)
    x = jax.random.normal(kx, (B, inc), dtype=jnp.float32)
    # fc.weight is [num_class, inc] in PyTorch; store transposed for the kernel.
    w = jax.random.normal(kw, (num_class, inc), dtype=jnp.float32) * (1.0 / jnp.sqrt(inc))
    w_t = w.T  # [inc, num_class]

    out = classifier_forward(x, w_t, temp=temp)
    out = jax.block_until_ready(out)

    # Reference check in plain JAX (same semantics as the PyTorch forward).
    norm = jnp.maximum(jnp.linalg.norm(x, axis=1, keepdims=True), 1e-12)
    ref = (x / norm) @ w_t / temp
    assert out.shape == (B, num_class)
    assert jnp.allclose(out, ref, atol=2e-4, rtol=2e-4), float(jnp.max(jnp.abs(out - ref)))

    print("KERNEL_OK")
</pallas_src>

<mosaic_0001>
module attributes {stable_mosaic.version = 11 : i64} {
  func.func @_classifier_kernel(%arg0: i32, %arg1: i32, %arg2: memref<8x32xf32, #tpu.memory_space<vmem>>, %arg3: memref<32x128xf32, #tpu.memory_space<vmem>>, %arg4: memref<8x128xf32, #tpu.memory_space<vmem>>) attributes {dimension_semantics = [#tpu.dimension_semantics<parallel>, #tpu.dimension_semantics<parallel>], iteration_bounds = array<i64: 1, 1>, scalar_prefetch = 0 : i64, scratch_operands = 0 : i64, tpu.core_type = #tpu.core_type<tc>, window_params = [{transform_indices = @transform_0, window_bounds = array<i64: 8, 32>}, {transform_indices = @transform_1, window_bounds = array<i64: 32, 128>}, {transform_indices = @transform_2, window_bounds = array<i64: 8, 128>}]} {
    %c0 = arith.constant 0 : index
    %c0_0 = arith.constant 0 : index
    %0 = vector.load %arg2[%c0, %c0_0] : memref<8x32xf32, #tpu.memory_space<vmem>>, vector<8x32xf32>
    %1 = arith.mulf %0, %0 : vector<8x32xf32>
    %cst = arith.constant dense<0.000000e+00> : vector<8xf32>
    %2 = vector.multi_reduction <add>, %1, %cst [1] : vector<8x32xf32> to vector<8xf32>
    %3 = vector.shape_cast %2 : vector<8xf32> to vector<8x1xf32>
    %cst_1 = arith.constant 1.000000e-24 : f32
    %4 = vector.broadcast %cst_1 : f32 to vector<8x1xf32>
    %5 = arith.maximumf %3, %4 : vector<8x1xf32>
    %6 = math.rsqrt %5 : vector<8x1xf32>
    %cst_2 = arith.constant 2.000000e+01 : f32
    %7 = vector.broadcast %cst_2 : f32 to vector<8x1xf32>
    %8 = arith.mulf %6, %7 : vector<8x1xf32>
    %9 = vector.broadcast %8 : vector<8x1xf32> to vector<8x32xf32>
    %10 = arith.mulf %0, %9 : vector<8x32xf32>
    %c0_3 = arith.constant 0 : index
    %c0_4 = arith.constant 0 : index
    %11 = vector.load %arg3[%c0_3, %c0_4] : memref<32x128xf32, #tpu.memory_space<vmem>>, vector<32x128xf32>
    %cst_5 = arith.constant dense<0.000000e+00> : vector<8x128xf32>
    %12 = tpu.matmul %10, %11, %cst_5 {dimension_numbers = #tpu.dot_dimension_numbers<[1], [0], [0], [1], [0, 0, 1, 1], [], []>} : vector<8x32xf32>, vector<32x128xf32>, vector<8x128xf32> -> vector<8x128xf32>
    %c0_6 = arith.constant 0 : index
    %c0_7 = arith.constant 0 : index
    %13 = vector.load %arg4[%c0_6, %c0_7] : memref<8x128xf32, #tpu.memory_space<vmem>>, vector<8x128xf32>
    tpu.vector_store %arg4[%c0_6, %c0_7], %12 {strides = array<i32>} : memref<8x128xf32, #tpu.memory_space<vmem>>, vector<8x128xf32>,
    return
  }
  func.func @transform_0(%arg0: i32, %arg1: i32) -> (i32, i32) {
    %c0_i32 = arith.constant 0 : i32
    %c0_i32_0 = arith.constant 0 : i32
    return %arg0, %c0_i32 : i32, i32
  }
  func.func @transform_1(%arg0: i32, %arg1: i32) -> (i32, i32) {
    %c0_i32 = arith.constant 0 : i32
    %c0_i32_0 = arith.constant 0 : i32
    return %c0_i32, %arg1 : i32, i32
  }
  func.func @transform_2(%arg0: i32, %arg1: i32) -> (i32, i32) {
    %c0_i32 = arith.constant 0 : i32
    return %arg0, %arg1 : i32, i32
  }
}

</mosaic_0001>

<llo_original>
// kernel: tpu_custom_call.1
$region0: #{tpu_custom_call.1}
  #allocation0 [shape = 'u32[]', space=smem, size = 0x4, offset = 0x4, fixed_abs, tag = 'smem constant byte address 0x4 - core index']
  #allocation1 [shape = 'u32[144,128]{1,0:T(1,128)}', space=vmem, size = 0x12000, scoped, tag = 'internal scratch']
  %s0 = inlined_call_operand.hbm [shape: f32[8,32], index: 0, kind: input, shape index: {}]
  %s1 = inlined_call_operand.hbm [shape: f32[32,128], index: 1, kind: input, shape index: {}]
  %s2 = inlined_call_operand.hbm [shape: f32[8,128], index: 2, kind: output, shape index: {}]
  %s3 = sld [smem:[#allocation0]]
  $region26: #{tpu_custom_call.1} parent=0
    _
  %s5 = ssub.s32 1, %s3
  %s6 = scalar_select 0, %s5, %s3
  $region1: #{tpu_custom_call.1} parent=0
    #allocation2 [shape = 'u8[4096]{0}', space=vmem, size = 0x1000, scoped, tag = 'input window, operand 0, single buffered']
    #allocation3 [shape = 's32[1]{0}', space=sflag, size = 0x4, scoped, tag = 'scoped memory for tpu_custom_call.1']
    #allocation4 [shape = 's32[1]{0}', space=sflag, size = 0x4, scoped, tag = 'scoped memory for tpu_custom_call.1']
    #allocation5 [shape = 'u8[16384]{0}', space=vmem, size = 0x4000, scoped, tag = 'input window, operand 1, single buffered']
    #allocation6 [shape = 's32[1]{0}', space=sflag, size = 0x4, scoped, tag = 'scoped memory for tpu_custom_call.1']
    #allocation7 [shape = 'u8[4096]{0}', space=vmem, size = 0x1000, scoped, tag = 'output window, operand 0, single buffered']
    %7 = vsyncpa [#allocation3], 0
    %8 = vsyncpa [#allocation6], 0
    %9 = vsyncpa [#allocation4], 0
    // Predicated region
    $region2: #{tpu_custom_call.1} parent=1 // pred_check
      _
    $region3: #{tpu_custom_call.1} parent=1 // pred_check_branch
      %11 = sbr.rel (0) target = $region5
    $region4: #{tpu_custom_call.1} parent=1 // pred_region
      %s13 = ssub.s32 128, 128
      %14 = vsyncadd [#allocation3], %s13
      %s16 = sshll.u32 [#allocation2], 4
      %s17 = int_to_ptr.vmem [resolvable:$true] %s16
      %19 = dma.hbm_to_vmem [thread:$0]  %s0, 128, %s17, [#allocation3]
    $region5: #{tpu_custom_call.1} parent=1 // pred_fallthru
      _
    // Predicated region
    $region6: #{tpu_custom_call.1} parent=1 // pred_check
      _
    $region7: #{tpu_custom_call.1} parent=1 // pred_check_branch
      %21 = sbr.rel (0) target = $region9
    $region8: #{tpu_custom_call.1} parent=1 // pred_region
      %s23 = ssub.s32 512, 512
      %24 = vsyncadd [#allocation6], %s23
      %s25 = sshll.u32 [#allocation5], 4
      %s26 = int_to_ptr.vmem [resolvable:$true] %s25
      %31 = dma.hbm_to_vmem [thread:$0]  %s1, 512, %s26, [#allocation6], 128, 128, 8
    $region9: #{tpu_custom_call.1} parent=1 // pred_fallthru
      _
    // Predicated region
    $region10: #{tpu_custom_call.1} parent=1 // pred_check
      _
    $region11: #{tpu_custom_call.1} parent=1 // pred_check_branch
      %33 = sbr.rel (0) target = $region13
    $region12: #{tpu_custom_call.1} parent=1 // pred_region
      %34 = dma.done [#allocation3], 128
    $region13: #{tpu_custom_call.1} parent=1 // pred_fallthru
      _
    // Predicated region
    $region14: #{tpu_custom_call.1} parent=1 // pred_check
      _
    $region15: #{tpu_custom_call.1} parent=1 // pred_check_branch
      %36 = sbr.rel (0) target = $region17
    $region16: #{tpu_custom_call.1} parent=1 // pred_region
      %37 = dma.done [#allocation6], 512
    $region17: #{tpu_custom_call.1} parent=1 // pred_fallthru
      _
    %v38 = vld [vmem:[#allocation2] sm:$0xff]
    %v39 = vmul.f32 %v38, %v38
    %vm40 = vcmask 261120
    %v41 = vsel %vm40, %v39, 0.0
    %42 = vadd.xlane.f32.xlu0 %v41
    %v43 = vpop.xlane.xlu0 %42
    %v44 = vmax.f32 %v43, 1e-24
    %v45 = vrsqrt.pop %v44
    %v46 = vmul.f32 %v45, 20.0
    %v47 = vmul.f32 %v38, %v46
    %v48 = vld [vmem:[#allocation5] sm:$0xff]
    %v49 = vld [vmem:[#allocation5 + $0x8] sm:$0xff]
    %v50 = vld [vmem:[#allocation5 + $0x10] sm:$0xff]
    %v51 = vld [vmem:[#allocation5 + $0x18] sm:$0xff]
    %v53 = vsel %vm40, %v47, 0
    %55 = vmatprep.subr.mxu0 0.0
    %56 = vmatpush1.msra.mxu0 0.0
    %57 = vmatprep.subr.mxu0 0.0
    %58 = vmatpush1.msra.mxu0 0.0
    %59 = vmatprep.subr.mxu0 0.0
    %60 = vmatpush1.msra.mxu0 0.0
    %61 = vmatprep.subr.mxu0 0.0
    %62 = vmatpush1.msra.mxu0 0.0
    %63 = vmatprep.subr.mxu0 0.0
    %64 = vmatpush1.msra.mxu0 0.0
    %65 = vmatprep.subr.mxu0 0.0
    %66 = vmatpush1.msra.mxu0 0.0
    %67 = vmatprep.subr.mxu0 0.0
    %68 = vmatpush1.msra.mxu0 0.0
    %69 = vmatprep.subr.mxu0 0.0
    %70 = vmatpush1.msra.mxu0 0.0
    %71 = vmatprep.subr.mxu0 0.0
    %72 = vmatpush1.msra.mxu0 0.0
    %73 = vmatprep.subr.mxu0 0.0
    %74 = vmatpush1.msra.mxu0 0.0
    %75 = vmatprep.subr.mxu0 0.0
    %76 = vmatpush1.msra.mxu0 0.0
    %77 = vmatprep.subr.mxu0 0.0
    %78 = vmatpush1.msra.mxu0 0.0
    %79 = vmatprep.subr.mxu0 0.0
    %80 = vmatpush1.msra.mxu0 %v51
    %81 = vmatprep.subr.mxu0 0.0
    %82 = vmatpush1.msra.mxu0 %v50
    %83 = vmatprep.subr.mxu0 0.0
    %84 = vmatpush1.msra.mxu0 %v49
    %85 = vmatprep.subr.mxu0 0.0
    %86 = vmatpush1.msra.mxu0 %v48
    %87 = vmatprep.subr.mxu0 0.0
    %88 = vmatpush2.msra.mxu0 0.0
    %89 = vmatprep.subr.mxu0 0.0
    %90 = vmatpush2.msra.mxu0 0.0
    %91 = vmatprep.subr.mxu0 0.0
    %92 = vmatpush2.msra.mxu0 0.0
    %93 = vmatprep.subr.mxu0 0.0
    %94 = vmatpush2.msra.mxu0 0.0
    %95 = vmatprep.subr.mxu0 0.0
    %96 = vmatpush2.msra.mxu0 0.0
    %97 = vmatprep.subr.mxu0 0.0
    %98 = vmatpush2.msra.mxu0 0.0
    %99 = vmatprep.subr.mxu0 0.0
    %100 = vmatpush2.msra.mxu0 0.0
    %101 = vmatprep.subr.mxu0 0.0
    %102 = vmatpush2.msra.mxu0 0.0
    %103 = vmatprep.subr.mxu0 0.0
    %104 = vmatpush2.msra.mxu0 0.0
    %105 = vmatprep.subr.mxu0 0.0
    %106 = vmatpush2.msra.mxu0 0.0
    %107 = vmatprep.subr.mxu0 0.0
    %108 = vmatpush2.msra.mxu0 0.0
    %109 = vmatprep.subr.mxu0 0.0
    %110 = vmatpush2.msra.mxu0 0.0
    %111 = vmatprep.subr.mxu0 0.0
    %112 = vmatpush2.msra.mxu0 0.0
    %113 = vmatprep.subr.mxu0 0.0
    %114 = vmatpush2.msra.mxu0 0.0
    %115 = vmatprep.subr.mxu0 0.0
    %116 = vmatpush2.msra.mxu0 0.0
    %117 = vmatprep.subr.mxu0 0.0
    %118 = vmatpush2.msra.mxu0 0.0
    %119 = vmatprep.mubr.f32.mxu0 0.0
    %120 = vmatmul.mubr.f32.gmra.mxu0 %v53
    %v121 = vpop.f32.mrf.mxu0
    %v122 = vadd.f32 0.0, %v121
    %v123 = vpop.f32.mrf.mxu0
    %124 = vdwg.mxu0
    %125 = vst [vmem:[#allocation7] sm:$0xff] %v122
    // Predicated region
    $region18: #{tpu_custom_call.1} parent=1 // pred_check
      _
    $region19: #{tpu_custom_call.1} parent=1 // pred_check_branch
      %127 = sbr.rel (0) target = $region21
    $region20: #{tpu_custom_call.1} parent=1 // pred_region
      %s129 = ssub.s32 128, 128
      %130 = vsyncadd [#allocation4], %s129
      %s132 = sshll.u32 [#allocation7], 4
      %s133 = int_to_ptr.vmem [resolvable:$true] %s132
      %135 = dma.vmem_to_hbm [thread:$0]  %s133, 128, %s2, [#allocation4]
    $region21: #{tpu_custom_call.1} parent=1 // pred_fallthru
      _
    // Predicated region
    $region22: #{tpu_custom_call.1} parent=1 // pred_check
      _
    $region23: #{tpu_custom_call.1} parent=1 // pred_check_branch
      %137 = sbr.rel (0) target = $region25
    $region24: #{tpu_custom_call.1} parent=1 // pred_region
      %138 = dma.done [#allocation4], 128
    $region25: #{tpu_custom_call.1} parent=1 // pred_fallthru
      _
    %139 = vsyncpa [#allocation3], 1
    %140 = vsyncpa [#allocation6], 1
    %141 = vsyncpa [#allocation4], 1

</llo_original>
